<compile_context>
chip_gen: v5e
topology: v5e:2x2
jax: 0.10.0
libtpu: 0.0.40
codegen_flags: <defaults>
</compile_context>

<pallas_src>
import functools

import jax
import jax.numpy as jnp
from jax.experimental import pallas as pl
from jax.experimental.pallas import tpu as pltpu

_NEG_LARGE = -1e30  # "masked" logit value (avoids inf arithmetic)


def _logits_stats_kernel(x_ref, wvu_ref, bvu_ref, ww_ref, bw_ref,
                         logits_ref, m_ref, l_ref,
                         m_sc, l_sc, *, n_valid, d):
    n = pl.program_id(0)
    k, tn = logits_ref.shape

    @pl.when(n == 0)
    def _():
        m_sc[...] = jnp.full_like(m_sc, _NEG_LARGE)
        l_sc[...] = jnp.zeros_like(l_sc)

    # Fused V|U projection: one MXU matmul for both gating branches.
    h = jnp.dot(x_ref[...], wvu_ref[...],
                preferred_element_type=jnp.float32) + bvu_ref[...]       # (TN, 2D) f32
    gated = jnp.tanh(h[:, :d]) * jax.nn.sigmoid(h[:, d:])                # (TN, D)  f32

    # Logits directly in (K, TN) layout: contract over D on both operands
    # (ww is kept in torch-native (K, D) layout -> no transpose needed).
    logits = jax.lax.dot_general(
        ww_ref[...].astype(jnp.float32), gated,
        dimension_numbers=(((1,), (1,)), ((), ())),
        preferred_element_type=jnp.float32) + bw_ref[...]                # (K, TN)

    if n_valid % tn != 0:
        # Only the last tile contains padded instance columns; mask them out.
        col = jax.lax.broadcasted_iota(jnp.int32, (k, tn), 1) + n * tn
        logits = jnp.where(col < n_valid, logits, _NEG_LARGE)

    logits_ref[...] = logits

    # Online softmax statistics (per K row, streamed over the N axis).
    tile_max = jnp.max(logits, axis=1, keepdims=True)                    # (K, 1)
    m_new = jnp.maximum(m_sc[...], tile_max)
    scale = jnp.exp(m_sc[...] - m_new)
    l_sc[...] = l_sc[...] * scale + jnp.sum(jnp.exp(logits - m_new),
                                            axis=1, keepdims=True)
    m_sc[...] = m_new

    # (K,1) outputs have constant block index -> stay resident in VMEM and are
    # written back to HBM once, after the last grid step.
    m_ref[...] = m_sc[...]
    l_ref[...] = l_sc[...]


def _normalize_kernel(logits_ref, m_ref, l_ref, out_ref):
    inv_l = 1.0 / l_ref[...]                                             # (K, 1)
    out_ref[...] = (jnp.exp(logits_ref[...] - m_ref[...]) * inv_l
                    ).astype(out_ref.dtype)


@functools.partial(jax.jit, static_argnames=("tile_n",))
def attention_gated(x, wv, bv, wu, bu, ww, bw, *, tile_n=128):
    """Gated-attention MIL pooling, matching Attention_Gated.forward(isNorm=True).

    Args:
      x:  (N, L) instances.
      wv, wu: (L, D) V/U projection weights (pre-transposed from torch (D, L)).
      bv, bu: (1, D) biases.
      ww: (K, D) attention-weight matrix (torch-native layout).
      bw: (K,)  bias.
    Returns:
      (K, N) softmax attention over instances.
    """
    n, l = x.shape
    d = wv.shape[1]
    k = ww.shape[0]

    tn = int(tile_n)
    assert tn % 128 == 0, "tile_n must be a multiple of 128 (lane-dense output)"
    n_pad = ((n + tn - 1) // tn) * tn
    if n_pad != n:
        x = jnp.pad(x, ((0, n_pad - n), (0, 0)))
    grid = (n_pad // tn,)

    # Fuse V/U weights so the kernel does a single (TN,L)x(L,2D) matmul.
    wvu = jnp.concatenate([wv, wu], axis=1)            # (L, 2D)
    bvu = jnp.concatenate([bv, bu], axis=1)            # (1, 2D)
    bw2 = bw.reshape(k, 1).astype(jnp.float32)         # (K, 1)

    kernel = functools.partial(_logits_stats_kernel, n_valid=n, d=d)

    # Pass 1: logits (unnormalized, already transposed to (K, N_pad)) +
    # streaming softmax statistics over the N axis.
    logits, m, lsum = pl.pallas_call(
        kernel,
        out_shape=(
            jax.ShapeDtypeStruct((k, n_pad), jnp.float32),
            jax.ShapeDtypeStruct((k, 1), jnp.float32),
            jax.ShapeDtypeStruct((k, 1), jnp.float32),
        ),
        grid_spec=pltpu.PrefetchScalarGridSpec(
            num_scalar_prefetch=0,
            grid=grid,
            in_specs=[
                pl.BlockSpec((tn, l), lambda i: (i, 0)),        # x tiles: pipelined
                pl.BlockSpec((l, 2 * d), lambda i: (0, 0)),     # fused weights: resident
                pl.BlockSpec((1, 2 * d), lambda i: (0, 0)),
                pl.BlockSpec((k, d), lambda i: (0, 0)),
                pl.BlockSpec((k, 1), lambda i: (0, 0)),
            ],
            out_specs=(
                pl.BlockSpec((k, tn), lambda i: (0, i)),        # lane-dense logits
                pl.BlockSpec((k, 1), lambda i: (0, 0)),         # running max
                pl.BlockSpec((k, 1), lambda i: (0, 0)),         # running exp-sum
            ),
            scratch_shapes=[
                pltpu.VMEM((k, 1), jnp.float32),
                pltpu.VMEM((k, 1), jnp.float32),
            ],
        ),
        compiler_params=pltpu.CompilerParams(
            dimension_semantics=("arbitrary",),    # streaming-softmax reduction axis
        ),
    )(x, wvu, bvu, ww, bw2)

    # Pass 2: normalize each (K, TN) tile; fully parallel over N.
    out = pl.pallas_call(
        _normalize_kernel,
        out_shape=jax.ShapeDtypeStruct((k, n_pad), jnp.float32),
        grid_spec=pltpu.PrefetchScalarGridSpec(
            num_scalar_prefetch=0,
            grid=grid,
            in_specs=[
                pl.BlockSpec((k, tn), lambda i: (0, i)),
                pl.BlockSpec((k, 1), lambda i: (0, 0)),
                pl.BlockSpec((k, 1), lambda i: (0, 0)),
            ],
            out_specs=pl.BlockSpec((k, tn), lambda i: (0, i)),
        ),
        compiler_params=pltpu.CompilerParams(
            dimension_semantics=("parallel",),
        ),
    )(logits, m, lsum)

    return out[:, :n]


def _init_linear(key, in_dim, out_dim, *, transpose=True):
    """PyTorch-style uniform(-1/sqrt(in), 1/sqrt(in)) init."""
    kw, kb = jax.random.split(key)
    bound = 1.0 / jnp.sqrt(jnp.float32(in_dim))
    w = jax.random.uniform(kw, (out_dim, in_dim), jnp.float32, -bound, bound)
    b = jax.random.uniform(kb, (out_dim,), jnp.float32, -bound, bound)
    if transpose:
        return w.T, b.reshape(1, out_dim)    # (in, out), (1, out) for the kernel
    return w, b                              # torch layout (out, in), (out,)


def reference(x, wv, bv, wu, bu, ww, bw):
    a_v = jnp.tanh(x @ wv + bv)
    a_u = jax.nn.sigmoid(x @ wu + bu)
    a = (a_v * a_u) @ ww.T + bw[None, :]
    return jax.nn.softmax(a.T, axis=1)


if __name__ == "__main__":
    # Small shapes consistent with Attention_Gated(L, D, K); N = MIL bag size.
    # N is deliberately NOT a multiple of the 128-wide tile so the padding /
    # masking and the multi-tile streaming-softmax path are exercised.
    N, L, D, K = 200, 64, 32, 2

    key = jax.random.PRNGKey(0)
    kx, kv, ku, kw = jax.random.split(key, 4)

    x = jax.random.normal(kx, (N, L), jnp.float32)
    wv, bv = _init_linear(kv, L, D)                    # attention_V: Linear + Tanh
    wu, bu = _init_linear(ku, L, D)                    # attention_U: Linear + Sigmoid
    ww, bw = _init_linear(kw, D, K, transpose=False)   # attention_weights: Linear(D, K)

    out = attention_gated(x, wv, bv, wu, bu, ww, bw)
    out = jax.block_until_ready(out)

    ref = reference(x, wv, bv, wu, bu, ww, bw)
    assert out.shape == (K, N), out.shape
    assert jnp.allclose(out, ref, atol=1e-5, rtol=1e-5)
    assert jnp.allclose(jnp.sum(out, axis=1), 1.0, atol=1e-5)

    print("KERNEL_OK")
</pallas_src>

<mosaic_0001>
module attributes {stable_mosaic.version = 11 : i64} {
  func.func @_normalize_kernel(%arg0: i32, %arg1: memref<2x128xf32, #tpu.memory_space<vmem>>, %arg2: memref<2x1xf32, #tpu.memory_space<vmem>>, %arg3: memref<2x1xf32, #tpu.memory_space<vmem>>, %arg4: memref<2x128xf32, #tpu.memory_space<vmem>>) attributes {dimension_semantics = [#tpu.dimension_semantics<parallel>], iteration_bounds = array<i64: 2>, scalar_prefetch = 0 : i64, scratch_operands = 0 : i64, tpu.core_type = #tpu.core_type<tc>, window_params = [{transform_indices = @transform_0, window_bounds = array<i64: 2, 128>}, {pipeline_mode = #tpu.pipeline_mode<synchronous>, transform_indices = @transform_1, window_bounds = array<i64: 2, 1>}, {pipeline_mode = #tpu.pipeline_mode<synchronous>, transform_indices = @transform_2, window_bounds = array<i64: 2, 1>}, {transform_indices = @transform_3, window_bounds = array<i64: 2, 128>}]} {
    %c0 = arith.constant 0 : index
    %c0_0 = arith.constant 0 : index
    %0 = vector.load %arg3[%c0, %c0_0] : memref<2x1xf32, #tpu.memory_space<vmem>>, vector<2x1xf32>
    %cst = arith.constant 1.000000e+00 : f32
    %1 = vector.broadcast %cst : f32 to vector<2x1xf32>
    %2 = arith.divf %1, %0 : vector<2x1xf32>
    %c0_1 = arith.constant 0 : index
    %c0_2 = arith.constant 0 : index
    %3 = vector.load %arg1[%c0_1, %c0_2] : memref<2x128xf32, #tpu.memory_space<vmem>>, vector<2x128xf32>
    %c0_3 = arith.constant 0 : index
    %c0_4 = arith.constant 0 : index
    %4 = vector.load %arg2[%c0_3, %c0_4] : memref<2x1xf32, #tpu.memory_space<vmem>>, vector<2x1xf32>
    %5 = vector.broadcast %4 : vector<2x1xf32> to vector<2x128xf32>
    %6 = arith.subf %3, %5 : vector<2x128xf32>
    %7 = math.exp %6 : vector<2x128xf32>
    %8 = vector.broadcast %2 : vector<2x1xf32> to vector<2x128xf32>
    %9 = arith.mulf %7, %8 : vector<2x128xf32>
    %c0_5 = arith.constant 0 : index
    %c0_6 = arith.constant 0 : index
    %10 = vector.load %arg4[%c0_5, %c0_6] : memref<2x128xf32, #tpu.memory_space<vmem>>, vector<2x128xf32>
    tpu.vector_store %arg4[%c0_5, %c0_6], %9 {strides = array<i32>} : memref<2x128xf32, #tpu.memory_space<vmem>>, vector<2x128xf32>,
    return
  }
  func.func @transform_0(%arg0: i32) -> (i32, i32) {
    %c0_i32 = arith.constant 0 : i32
    %c0_i32_0 = arith.constant 0 : i32
    return %c0_i32, %arg0 : i32, i32
  }
  func.func @transform_1(%arg0: i32) -> (i32, i32) {
    %c0_i32 = arith.constant 0 : i32
    %c0_i32_0 = arith.constant 0 : i32
    %c0_i32_1 = arith.constant 0 : i32
    return %c0_i32, %c0_i32_0 : i32, i32
  }
  func.func @transform_2(%arg0: i32) -> (i32, i32) {
    %c0_i32 = arith.constant 0 : i32
    %c0_i32_0 = arith.constant 0 : i32
    %c0_i32_1 = arith.constant 0 : i32
    return %c0_i32, %c0_i32_0 : i32, i32
  }
  func.func @transform_3(%arg0: i32) -> (i32, i32) {
    %c0_i32 = arith.constant 0 : i32
    %c0_i32_0 = arith.constant 0 : i32
    return %c0_i32, %arg0 : i32, i32
  }
}

module attributes {stable_mosaic.version = 11 : i64} {
  func.func @_logits_stats_kernel(%arg0: i32, %arg1: memref<128x64xf32, #tpu.memory_space<vmem>>, %arg2: memref<64x64xf32, #tpu.memory_space<vmem>>, %arg3: memref<1x64xf32, #tpu.memory_space<vmem>>, %arg4: memref<2x32xf32, #tpu.memory_space<vmem>>, %arg5: memref<2x1xf32, #tpu.memory_space<vmem>>, %arg6: memref<2x128xf32, #tpu.memory_space<vmem>>, %arg7: memref<2x1xf32, #tpu.memory_space<vmem>>, %arg8: memref<2x1xf32, #tpu.memory_space<vmem>>, %arg9: memref<2x1xf32, #tpu.memory_space<vmem>>, %arg10: memref<2x1xf32, #tpu.memory_space<vmem>>) attributes {dimension_semantics = [#tpu.dimension_semantics<arbitrary>], iteration_bounds = array<i64: 2>, scalar_prefetch = 0 : i64, scratch_operands = 2 : i64, tpu.core_type = #tpu.core_type<tc>, window_params = [{transform_indices = @transform_0, window_bounds = array<i64: 128, 64>}, {pipeline_mode = #tpu.pipeline_mode<synchronous>, transform_indices = @transform_1, window_bounds = array<i64: 64, 64>}, {pipeline_mode = #tpu.pipeline_mode<synchronous>, transform_indices = @transform_2, window_bounds = array<i64: 1, 64>}, {pipeline_mode = #tpu.pipeline_mode<synchronous>, transform_indices = @transform_3, window_bounds = array<i64: 2, 32>}, {pipeline_mode = #tpu.pipeline_mode<synchronous>, transform_indices = @transform_4, window_bounds = array<i64: 2, 1>}, {transform_indices = @transform_5, window_bounds = array<i64: 2, 128>}, {pipeline_mode = #tpu.pipeline_mode<synchronous>, transform_indices = @transform_6, window_bounds = array<i64: 2, 1>}, {pipeline_mode = #tpu.pipeline_mode<synchronous>, transform_indices = @transform_7, window_bounds = array<i64: 2, 1>}]} {
    %c0_i32 = arith.constant 0 : i32
    %0 = arith.cmpi eq, %arg0, %c0_i32 : i32
    %1 = arith.extui %0 : i1 to i32
    %c0_i32_0 = arith.constant 0 : i32
    %2 = arith.cmpi ne, %1, %c0_i32_0 : i32
    scf.if %2 {
      %cst_35 = arith.constant -1.000000e+30 : f32
      %53 = vector.broadcast %cst_35 : f32 to vector<2x1xf32>
      %c0_36 = arith.constant 0 : index
      %c0_37 = arith.constant 0 : index
      %54 = vector.load %arg9[%c0_36, %c0_37] : memref<2x1xf32, #tpu.memory_space<vmem>>, vector<2x1xf32>
      tpu.vector_store %arg9[%c0_36, %c0_37], %53 {strides = array<i32>} : memref<2x1xf32, #tpu.memory_space<vmem>>, vector<2x1xf32>,
      %cst_38 = arith.constant 0.000000e+00 : f32
      %55 = vector.broadcast %cst_38 : f32 to vector<2x1xf32>
      %c0_39 = arith.constant 0 : index
      %c0_40 = arith.constant 0 : index
      %56 = vector.load %arg10[%c0_39, %c0_40] : memref<2x1xf32, #tpu.memory_space<vmem>>, vector<2x1xf32>
      tpu.vector_store %arg10[%c0_39, %c0_40], %55 {strides = array<i32>} : memref<2x1xf32, #tpu.memory_space<vmem>>, vector<2x1xf32>,
    } else {
    }
    %c0 = arith.constant 0 : index
    %c0_1 = arith.constant 0 : index
    %3 = vector.load %arg1[%c0, %c0_1] : memref<128x64xf32, #tpu.memory_space<vmem>>, vector<128x64xf32>
    %c0_2 = arith.constant 0 : index
    %c0_3 = arith.constant 0 : index
    %4 = vector.load %arg2[%c0_2, %c0_3] : memref<64x64xf32, #tpu.memory_space<vmem>>, vector<64x64xf32>
    %cst = arith.constant dense<0.000000e+00> : vector<128x64xf32>
    %5 = tpu.matmul %3, %4, %cst {dimension_numbers = #tpu.dot_dimension_numbers<[1], [0], [0], [1], [0, 0, 1, 1], [], []>} : vector<128x64xf32>, vector<64x64xf32>, vector<128x64xf32> -> vector<128x64xf32>
    %c0_4 = arith.constant 0 : index
    %c0_5 = arith.constant 0 : index
    %6 = vector.load %arg3[%c0_4, %c0_5] : memref<1x64xf32, #tpu.memory_space<vmem>>, vector<1x64xf32>
    %7 = vector.broadcast %6 : vector<1x64xf32> to vector<128x64xf32>
    %8 = arith.addf %5, %7 : vector<128x64xf32>
    %9 = vector.extract_strided_slice %8 {offsets = [0, 0], sizes = [128, 32], strides = [1, 1]} : vector<128x64xf32> to vector<128x32xf32>
    %10 = math.tanh %9 : vector<128x32xf32>
    %11 = vector.extract_strided_slice %8 {offsets = [0, 32], sizes = [128, 32], strides = [1, 1]} : vector<128x64xf32> to vector<128x32xf32>
    %12 = arith.negf %11 : vector<128x32xf32>
    %13 = math.exp %12 : vector<128x32xf32>
    %cst_6 = arith.constant 1.000000e+00 : f32
    %14 = vector.broadcast %cst_6 : f32 to vector<128x32xf32>
    %15 = arith.addf %14, %13 : vector<128x32xf32>
    %16 = arith.divf %14, %15 : vector<128x32xf32>
    %17 = arith.mulf %10, %16 : vector<128x32xf32>
    %c0_7 = arith.constant 0 : index
    %c0_8 = arith.constant 0 : index
    %18 = vector.load %arg4[%c0_7, %c0_8] : memref<2x32xf32, #tpu.memory_space<vmem>>, vector<2x32xf32>
    %cst_9 = arith.constant dense<0.000000e+00> : vector<2x128xf32>
    %19 = tpu.matmul %18, %17, %cst_9 {dimension_numbers = #tpu.dot_dimension_numbers<[1], [1], [0], [0], [0, 0, 1, 0], [], []>} : vector<2x32xf32>, vector<128x32xf32>, vector<2x128xf32> -> vector<2x128xf32>
    %c0_10 = arith.constant 0 : index
    %c0_11 = arith.constant 0 : index
    %20 = vector.load %arg5[%c0_10, %c0_11] : memref<2x1xf32, #tpu.memory_space<vmem>>, vector<2x1xf32>
    %21 = vector.broadcast %20 : vector<2x1xf32> to vector<2x128xf32>
    %22 = arith.addf %19, %21 : vector<2x128xf32>
    %23 = tpu.iota {dimensions = array<i32: 1>} : vector<2x128xi32>
    %c128_i32 = arith.constant 128 : i32
    %24 = arith.muli %arg0, %c128_i32 : i32
    %25 = vector.broadcast %24 : i32 to vector<2x128xi32>
    %26 = arith.addi %23, %25 : vector<2x128xi32>
    %c200_i32 = arith.constant 200 : i32
    %27 = vector.broadcast %c200_i32 : i32 to vector<2x128xi32>
    %28 = arith.cmpi slt, %26, %27 : vector<2x128xi32>
    %cst_12 = arith.constant -1.000000e+30 : f32
    %29 = vector.broadcast %cst_12 : f32 to vector<2x128xf32>
    %30 = arith.select %28, %22, %29 : vector<2x128xi1>, vector<2x128xf32>
    %c0_13 = arith.constant 0 : index
    %c0_14 = arith.constant 0 : index
    %31 = vector.load %arg6[%c0_13, %c0_14] : memref<2x128xf32, #tpu.memory_space<vmem>>, vector<2x128xf32>
    tpu.vector_store %arg6[%c0_13, %c0_14], %30 {strides = array<i32>} : memref<2x128xf32, #tpu.memory_space<vmem>>, vector<2x128xf32>,
    %cst_15 = arith.constant dense<0xFF800000> : vector<2xf32>
    %32 = vector.multi_reduction <maximumf>, %30, %cst_15 [1] : vector<2x128xf32> to vector<2xf32>
    %33 = vector.shape_cast %32 : vector<2xf32> to vector<2x1xf32>
    %c0_16 = arith.constant 0 : index
    %c0_17 = arith.constant 0 : index
    %34 = vector.load %arg9[%c0_16, %c0_17] : memref<2x1xf32, #tpu.memory_space<vmem>>, vector<2x1xf32>
    %35 = arith.maximumf %34, %33 : vector<2x1xf32>
    %c0_18 = arith.constant 0 : index
    %c0_19 = arith.constant 0 : index
    %36 = vector.load %arg9[%c0_18, %c0_19] : memref<2x1xf32, #tpu.memory_space<vmem>>, vector<2x1xf32>
    %37 = arith.subf %36, %35 : vector<2x1xf32>
    %38 = math.exp %37 : vector<2x1xf32>
    %c0_20 = arith.constant 0 : index
    %c0_21 = arith.constant 0 : index
    %39 = vector.load %arg10[%c0_20, %c0_21] : memref<2x1xf32, #tpu.memory_space<vmem>>, vector<2x1xf32>
    %40 = arith.mulf %39, %38 : vector<2x1xf32>
    %41 = vector.broadcast %35 : vector<2x1xf32> to vector<2x128xf32>
    %42 = arith.subf %30, %41 : vector<2x128xf32>
    %43 = math.exp %42 : vector<2x128xf32>
    %cst_22 = arith.constant dense<0.000000e+00> : vector<2xf32>
    %44 = vector.multi_reduction <add>, %43, %cst_22 [1] : vector<2x128xf32> to vector<2xf32>
    %45 = vector.shape_cast %44 : vector<2xf32> to vector<2x1xf32>
    %46 = arith.addf %40, %45 : vector<2x1xf32>
    %c0_23 = arith.constant 0 : index
    %c0_24 = arith.constant 0 : index
    %47 = vector.load %arg10[%c0_23, %c0_24] : memref<2x1xf32, #tpu.memory_space<vmem>>, vector<2x1xf32>
    tpu.vector_store %arg10[%c0_23, %c0_24], %46 {strides = array<i32>} : memref<2x1xf32, #tpu.memory_space<vmem>>, vector<2x1xf32>,
    %c0_25 = arith.constant 0 : index
    %c0_26 = arith.constant 0 : index
    %48 = vector.load %arg9[%c0_25, %c0_26] : memref<2x1xf32, #tpu.memory_space<vmem>>, vector<2x1xf32>
    tpu.vector_store %arg9[%c0_25, %c0_26], %35 {strides = array<i32>} : memref<2x1xf32, #tpu.memory_space<vmem>>, vector<2x1xf32>,
    %c0_27 = arith.constant 0 : index
    %c0_28 = arith.constant 0 : index
    %49 = vector.load %arg9[%c0_27, %c0_28] : memref<2x1xf32, #tpu.memory_space<vmem>>, vector<2x1xf32>
    %c0_29 = arith.constant 0 : index
    %c0_30 = arith.constant 0 : index
    %50 = vector.load %arg7[%c0_29, %c0_30] : memref<2x1xf32, #tpu.memory_space<vmem>>, vector<2x1xf32>
    tpu.vector_store %arg7[%c0_29, %c0_30], %49 {strides = array<i32>} : memref<2x1xf32, #tpu.memory_space<vmem>>, vector<2x1xf32>,
    %c0_31 = arith.constant 0 : index
    %c0_32 = arith.constant 0 : index
    %51 = vector.load %arg10[%c0_31, %c0_32] : memref<2x1xf32, #tpu.memory_space<vmem>>, vector<2x1xf32>
    %c0_33 = arith.constant 0 : index
    %c0_34 = arith.constant 0 : index
    %52 = vector.load %arg8[%c0_33, %c0_34] : memref<2x1xf32, #tpu.memory_space<vmem>>, vector<2x1xf32>
    tpu.vector_store %arg8[%c0_33, %c0_34], %51 {strides = array<i32>} : memref<2x1xf32, #tpu.memory_space<vmem>>, vector<2x1xf32>,
    return
  }
  func.func @transform_0(%arg0: i32) -> (i32, i32) {
    %c0_i32 = arith.constant 0 : i32
    %c0_i32_0 = arith.constant 0 : i32
    return %arg0, %c0_i32 : i32, i32
  }
  func.func @transform_1(%arg0: i32) -> (i32, i32) {
    %c0_i32 = arith.constant 0 : i32
    %c0_i32_0 = arith.constant 0 : i32
    %c0_i32_1 = arith.constant 0 : i32
    return %c0_i32, %c0_i32_0 : i32, i32
  }
  func.func @transform_2(%arg0: i32) -> (i32, i32) {
    %c0_i32 = arith.constant 0 : i32
    %c0_i32_0 = arith.constant 0 : i32
    %c0_i32_1 = arith.constant 0 : i32
    return %c0_i32, %c0_i32_0 : i32, i32
  }
  func.func @transform_3(%arg0: i32) -> (i32, i32) {
    %c0_i32 = arith.constant 0 : i32
    %c0_i32_0 = arith.constant 0 : i32
    %c0_i32_1 = arith.constant 0 : i32
    return %c0_i32, %c0_i32_0 : i32, i32
  }
  func.func @transform_4(%arg0: i32) -> (i32, i32) {
    %c0_i32 = arith.constant 0 : i32
    %c0_i32_0 = arith.constant 0 : i32
    %c0_i32_1 = arith.constant 0 : i32
    return %c0_i32, %c0_i32_0 : i32, i32
  }
  func.func @transform_5(%arg0: i32) -> (i32, i32) {
    %c0_i32 = arith.constant 0 : i32
    %c0_i32_0 = arith.constant 0 : i32
    return %c0_i32, %arg0 : i32, i32
  }
  func.func @transform_6(%arg0: i32) -> (i32, i32) {
    %c0_i32 = arith.constant 0 : i32
    %c0_i32_0 = arith.constant 0 : i32
    %c0_i32_1 = arith.constant 0 : i32
    return %c0_i32, %c0_i32_0 : i32, i32
  }
  func.func @transform_7(%arg0: i32) -> (i32, i32) {
    %c0_i32 = arith.constant 0 : i32
    %c0_i32_0 = arith.constant 0 : i32
    %c0_i32_1 = arith.constant 0 : i32
    return %c0_i32, %c0_i32_0 : i32, i32
  }
}

</mosaic_0001>

<llo_original>
// kernel: attention_gated.3
$region0: #{attention_gated.3}
  #allocation0 [shape = 'u32[]', space=smem, size = 0x4, offset = 0x4, fixed_abs, tag = 'smem constant byte address 0x4 - core index']
  #allocation1 [shape = 'u32[72,128]{1,0:T(1,128)}', space=vmem, size = 0x9000, scoped, tag = 'internal scratch']
  %s0 = inlined_call_operand.vmem [shape: f32[2,256], index: 0, kind: input, shape index: {}]
  %s1 = inlined_call_operand.vmem [shape: f32[2,1], index: 1, kind: input, shape index: {}]
  %s2 = inlined_call_operand.vmem [shape: f32[2,1], index: 2, kind: input, shape index: {}]
  %s3 = inlined_call_operand.hbm [shape: f32[2,256], index: 3, kind: output, shape index: {}]
  %s4 = sld [smem:[#allocation0]]
  $region45: #{attention_gated.3} parent=0
    _
  %s6 = ssub.s32 1, %s4
  %s7 = scalar_select 0, %s6, %s4
  $region1: #{attention_gated.3} parent=0
    #allocation2 [shape = 'u8[2048]{0}', space=vmem, size = 0x800, scoped, tag = 'output window, operand 0']
    #allocation3 [shape = 's32[2]{0}', space=sflag, size = 0x8, scoped, tag = 'scoped memory for attention_gated.3']
    %8 = vsyncpa [#allocation3], 0
    %s9 = scalar_lea.sflag [#allocation3], 1
    %10 = vsyncpa %s9, 0
    loop: start=0, step=1, limit=4
    $region2: #{attention_gated.3} parent=1 // loop_pre_header
      _
    $region3: #{attention_gated.3} parent=1 // loop_header
      %s12 = sphi 0, %s16
      %p13 = scmp.ge.s32.totalorder %s12, 4
      %s22 = sphi 0, %s24
      %s25 = sphi 0, %s22
      %s26 = sphi 0, %s25
      %s42 = sphi 0, %s26
      %s46 = sphi 0, %s46
      %s48 = sphi 0, %s46
      %s49 = sphi 0, %s48
      %s63 = sphi 0, %s49
      %s67 = sphi 0, %s67
      %s69 = sphi 0, %s67
      %s70 = sphi 0, %s69
      %s84 = sphi 0, %s70
      %s90 = sphi 0, %s92
      %s93 = sphi 0, %s90
      %s94 = sphi 0, %s93
      %s110 = sphi 0, %s94
    $region4: #{attention_gated.3} parent=1 // loop_header_branch
      %15 = sbr.rel (%p13) target = $region8
    $region5: #{attention_gated.3} parent=1 // loop_body
      %s17 = ssub.s32 %s12, 1
      %s18 = ssub.s32 %s12, 2
      %s19 = sadd.s32 %s12, 1
      %s20 = ssub.s32 %s12, %s19
      %p21 = scmp.eq.s32.totalorder %s20, 0
      %s23 = sadd.s32 %s22, 1
      %s24 = scalar_select %p21, %s22, %s23
      %p27 = pneg %p21
      %p28 = scmp.eq.s32.totalorder %s12, 1
      %p29 = por %p27, %p28
      %p30 = scmp.ne.s32.totalorder %s22, %s25
      %p31 = scmp.eq.s32.totalorder %s12, 0
      %p32 = por %p30, %p31
      %p33 = scmp.ne.s32.totalorder %s22, %s25
      %p34 = scmp.eq.s32.totalorder %s17, 1
      %p35 = por %p33, %p34
      %p36 = scmp.ne.s32.totalorder %s25, %s26
      %p37 = scmp.eq.s32.totalorder %s17, 0
      %p38 = por %p36, %p37
      %p39 = scmp.ne.s32.totalorder %s25, %s26
      %p40 = scmp.eq.s32.totalorder %s18, 1
      %p41 = por %p39, %p40
      %p43 = scmp.ne.s32.totalorder %s26, %s42
      %p44 = scmp.eq.s32.totalorder %s18, 0
      %p45 = por %p43, %p44
      %s47 = sadd.s32 %s46, 1
      %p50 = scmp.eq.s32.totalorder %s12, 1
      %p51 = scmp.ne.s32.totalorder %s46, %s48
      %p52 = scmp.eq.s32.totalorder %s12, 0
      %p53 = por %p51, %p52
      %p54 = scmp.ne.s32.totalorder %s46, %s48
      %p55 = scmp.eq.s32.totalorder %s17, 1
      %p56 = por %p54, %p55
      %p57 = scmp.ne.s32.totalorder %s48, %s49
      %p58 = scmp.eq.s32.totalorder %s17, 0
      %p59 = por %p57, %p58
      %p60 = scmp.ne.s32.totalorder %s48, %s49
      %p61 = scmp.eq.s32.totalorder %s18, 1
      %p62 = por %p60, %p61
      %p64 = scmp.ne.s32.totalorder %s49, %s63
      %p65 = scmp.eq.s32.totalorder %s18, 0
      %p66 = por %p64, %p65
      %s68 = sadd.s32 %s67, 1
      %p71 = scmp.eq.s32.totalorder %s12, 1
      %p72 = scmp.ne.s32.totalorder %s67, %s69
      %p73 = scmp.eq.s32.totalorder %s12, 0
      %p74 = por %p72, %p73
      %p75 = scmp.ne.s32.totalorder %s67, %s69
      %p76 = scmp.eq.s32.totalorder %s17, 1
      %p77 = por %p75, %p76
      %p78 = scmp.ne.s32.totalorder %s69, %s70
      %p79 = scmp.eq.s32.totalorder %s17, 0
      %p80 = por %p78, %p79
      %p81 = scmp.ne.s32.totalorder %s69, %s70
      %p82 = scmp.eq.s32.totalorder %s18, 1
      %p83 = por %p81, %p82
      %p85 = scmp.ne.s32.totalorder %s70, %s84
      %p86 = scmp.eq.s32.totalorder %s18, 0
      %p87 = por %p85, %p86
      %s88 = ssub.s32 %s12, %s19
      %p89 = scmp.eq.s32.totalorder %s88, 0
      %s91 = sadd.s32 %s90, 1
      %s92 = scalar_select %p89, %s90, %s91
      %p95 = pneg %p89
      %p96 = scmp.eq.s32.totalorder %s12, 1
      %p97 = por %p95, %p96
      %p98 = scmp.ne.s32.totalorder %s90, %s93
      %p99 = scmp.eq.s32.totalorder %s12, 0
      %p100 = por %p98, %p99
      %p101 = scmp.ne.s32.totalorder %s90, %s93
      %p102 = scmp.eq.s32.totalorder %s17, 1
      %p103 = por %p101, %p102
      %p104 = scmp.ne.s32.totalorder %s93, %s94
      %p105 = scmp.eq.s32.totalorder %s17, 0
      %p106 = por %p104, %p105
      %p107 = scmp.ne.s32.totalorder %s93, %s94
      %p108 = scmp.eq.s32.totalorder %s18, 1
      %p109 = por %p107, %p108
      %p111 = scmp.ne.s32.totalorder %s94, %s110
      %p112 = scmp.eq.s32.totalorder %s18, 0
      %p113 = por %p111, %p112
      %p114 = scmp.le.s32.totalorder 1, %s12
      %p115 = scmp.lt.s32.totalorder %s12, 3
      %p116 = pnand %p114, %p115
      %p117 = pneg %p116
      // Predicated region
      $region9: #{attention_gated.3} parent=5 // pred_check
        _
      $region10: #{attention_gated.3} parent=5 // pred_check_branch
        %119 = sbr.rel (%p116) target = $region12
      $region11: #{attention_gated.3} parent=5 // pred_region
        %s120 = ssub.s32 %s12, 1
        // Predicated region
        $region13: #{attention_gated.3} parent=11 // pred_check
          %p121 = pneg %p59
        $region14: #{attention_gated.3} parent=11 // pred_check_branch
          %123 = sbr.rel (%p121) target = $region16
        $region15: #{attention_gated.3} parent=11 // pred_region
          _
        $region16: #{attention_gated.3} parent=11 // pred_fallthru
          _
        // Predicated region
        $region17: #{attention_gated.3} parent=11 // pred_check
          %p124 = pneg %p80
        $region18: #{attention_gated.3} parent=11 // pred_check_branch
          %126 = sbr.rel (%p124) target = $region20
        $region19: #{attention_gated.3} parent=11 // pred_region
          _
        $region20: #{attention_gated.3} parent=11 // pred_fallthru
          _
      $region12: #{attention_gated.3} parent=5 // pred_fallthru
        _
      %p127 = scmp.lt.s32.totalorder %s12, 2
      // Predicated region
      $region21: #{attention_gated.3} parent=5 // pred_check
        %p128 = pneg %p127
      $region22: #{attention_gated.3} parent=5 // pred_check_branch
        %130 = sbr.rel (%p128) target = $region24
      $region23: #{attention_gated.3} parent=5 // pred_region
        // Predicated region
        $region25: #{attention_gated.3} parent=23 // pred_check
          %p131 = pneg %p32
        $region26: #{attention_gated.3} parent=23 // pred_check_branch
          %133 = sbr.rel (%p131) target = $region28
        $region27: #{attention_gated.3} parent=23 // pred_region
          %p134 = scmp.lt.s32.totalorder %s12, 1
          %s135 = scalar_select %p134, %s12, 1
          %s136 = smul.addr %s135, 2
          %s137 = scalar_lea.vmem %s0, %s136
        $region28: #{attention_gated.3} parent=23 // pred_fallthru
          _
      $region24: #{attention_gated.3} parent=5 // pred_fallthru
        _
      %p138 = scmp.le.s32.totalorder 1, %s12
      %p139 = scmp.lt.s32.totalorder %s12, 3
      %p140 = pnand %p138, %p139
      %p141 = pneg %p140
      // Predicated region
      $region29: #{attention_gated.3} parent=5 // pred_check
        _
      $region30: #{attention_gated.3} parent=5 // pred_check_branch
        %143 = sbr.rel (%p140) target = $region32
      $region31: #{attention_gated.3} parent=5 // pred_region
        %s144 = ssub.s32 %s12, 1
        %p145 = scmp.lt.s32.totalorder %s17, 1
        %s146 = scalar_select %p145, %s17, 1
        %s147 = smul.addr %s146, 2
        %s148 = scalar_lea.vmem %s0, %s147
        %p149 = pneg %p38
        %p150 = pneg %p35
        %p151 = pneg %p59
        %p152 = pneg %p56
        %p153 = pneg %p80
        %p154 = pneg %p77
        %p155 = pneg %p106
        %p156 = pneg %p103
        %s157 = sand.u32 %s93, 1
        %s158 = scalar_lea.sflag [#allocation3], %s157
        %s159 = sand.u32 %s93, 1
        %s160 = smul.addr %s159, 2
        %s161 = scalar_lea.vmem [#allocation2], %s160
        %p162 = scmp.lt.s32.totalorder %s17, 1
        %s163 = scalar_select %p162, %s17, 1
        %s164 = smul.addr %s163, 2
        %s165 = scalar_lea.vmem %s0, %s164
        %v166 = vld [vmem:[%s2] sm:$0x3]
        %v167 = vrcp.pop %v166
        %v168 = vmul.f32 %v166, %v167
        %v169 = vsub.f32 1.0, %v168
        %v170 = vmul.f32 %v167, %v169
        %v171 = vadd.f32 %v167, %v170
        %vm172 = vweird.f32 %v166
        %vm173 = vweird.f32 %v167
        %vm174 = vmor %vm172, %vm173
        %v175 = vsel %vm174, %v167, %v171
        %v176 = vand.u32 2147483647, %v166
        %vm177 = vcmp.eq.f32.partialorder %v176, 8.507059e+37
        %v178 = vand.u32 %v166, 2147483648
        %v179 = vor.u32 1.1754944e-38, %v178
        %v180 = vsel %vm177, %v179, %v175
        %v181 = vmul.f32 1.0, %v180
        %v182 = vld [vmem:[%s165] sm:$0x3]
        %v183 = vld [vmem:[%s1] sm:$0x3]
        %185 = vset.pattern.permute.xlu0 0
        %186 = vperm.xlu0 %185, %v183
        %v187 = vpop.permute.xlu0 %186
        %v189 = vsub.f32 %v182, %v187
        %v190 = vmul.f32 %v189, 1.442695
        %v191 = vpow.pop %v190
        %193 = vset.pattern.permute.xlu0 0
        %194 = vperm.xlu0 %193, %v181
        %v195 = vpop.permute.xlu0 %194
        %v197 = vmul.f32 %v191, %v195
        %198 = vst [vmem:[%s161] sm:$0x3] %v197
        %s199 = sand.u32 %s93, 1
        %s200 = scalar_lea.sflag [#allocation3], %s199
        %s201 = sand.u32 %s93, 1
        %s202 = smul.addr %s201, 2
        %s203 = scalar_lea.vmem [#allocation2], %s202
        // Predicated region
        $region33: #{attention_gated.3} parent=31 // pred_check
          %p204 = pneg %p103
        $region34: #{attention_gated.3} parent=31 // pred_check_branch
          %206 = sbr.rel (%p204) target = $region36
        $region35: #{attention_gated.3} parent=31 // pred_region
          %208 = vsyncadd %s200, 0
          %s209 = smul.addr %s17, 2
          %s210 = scalar_lea.hbm %s3, %s209
          %s212 = sshll.u32 %s203, 4
          %s213 = int_to_ptr.vmem [resolvable:$true] %s212
          %s214 = sshll.u32 %s210, 4
          %s215 = int_to_ptr.hbm [resolvable:$true] %s214
          %217 = dma.vmem_to_hbm [thread:$0]  %s213, 32, %s215, %s200
        $region36: #{attention_gated.3} parent=31 // pred_fallthru
          _
      $region32: #{attention_gated.3} parent=5 // pred_fallthru
        _
      %p218 = scmp.le.s32.totalorder 2, %s12
      // Predicated region
      $region37: #{attention_gated.3} parent=5 // pred_check
        %p219 = pneg %p218
      $region38: #{attention_gated.3} parent=5 // pred_check_branch
        %221 = sbr.rel (%p219) target = $region40
      $region39: #{attention_gated.3} parent=5 // pred_region
        %s222 = ssub.s32 %s12, 2
        // Predicated region
        $region41: #{attention_gated.3} parent=39 // pred_check
          %p223 = pneg %p109
        $region42: #{attention_gated.3} parent=39 // pred_check_branch
          %225 = sbr.rel (%p223) target = $region44
        $region43: #{attention_gated.3} parent=39 // pred_region
          %s226 = sand.u32 %s94, 1
          %s227 = scalar_lea.sflag [#allocation3], %s226
          %s228 = sand.u32 %s94, 1
          %s229 = smul.addr %s228, 2
          %s230 = scalar_lea.vmem [#allocation2], %s229
          %232 = dma.done %s227, 32
        $region44: #{attention_gated.3} parent=39 // pred_fallthru
          _
      $region40: #{attention_gated.3} parent=5 // pred_fallthru
        _
    $region6: #{attention_gated.3} parent=1 // loop_footer
      %s16 = sadd.s32 1, %s12
    $region7: #{attention_gated.3} parent=1 // loop_footer_branch
      %11 = sbr.rel target = $region3
    $region8: #{attention_gated.3} parent=1 // loop_exit
      _
    %233 = vsyncpa [#allocation3], 1
    %s234 = scalar_lea.sflag [#allocation3], 1
    %235 = vsyncpa %s234, 1

// kernel: attention_gated.2
$region0: #{attention_gated.2}
  #allocation0 [shape = 'u32[]', space=smem, size = 0x4, offset = 0x4, fixed_abs, tag = 'smem constant byte address 0x4 - core index']
  #allocation1 [shape = 'u32[72,128]{1,0:T(1,128)}', space=vmem, size = 0x9000, scoped, tag = 'internal scratch']
  #allocation2 [shape = 'f32[2,1]{1,0:T(2,128)}', space=vmem, size = 0x400, scoped, tag = 'scratch operand']
  #allocation3 [shape = 'f32[2,1]{1,0:T(2,128)}', space=vmem, size = 0x400, scoped, tag = 'scratch operand']
  %s0 = inlined_call_operand.vmem [shape: f32[256,64], index: 0, kind: input, shape index: {}]
  %s1 = inlined_call_operand.vmem [shape: f32[64,64], index: 1, kind: input, shape index: {}]
  %s2 = inlined_call_operand.vmem [shape: f32[1,64], index: 2, kind: input, shape index: {}]
  %s3 = inlined_call_operand.vmem [shape: f32[2,32], index: 3, kind: input, shape index: {}]
  %s4 = inlined_call_operand.vmem [shape: f32[2,1], index: 4, kind: input, shape index: {}]
  %s5 = inlined_call_operand.vmem [shape: f32[2,256], index: 5, kind: output, shape index: {0}]
  %s6 = inlined_call_operand.vmem [shape: f32[2,1], index: 6, kind: output, shape index: {1}]
  %s7 = inlined_call_operand.vmem [shape: f32[2,1], index: 7, kind: output, shape index: {2}]
  %8 = xla_tuple %s5, %s6, %s7
  %s9 = sld [smem:[#allocation0]]
  $region73: #{attention_gated.2} parent=0
    _
  %s11 = ssub.s32 1, %s9
  %s12 = scalar_select 0, %s11, %s9
  loop: start=0, step=1, limit=4
  $region2: #{attention_gated.2} parent=0 // loop_pre_header
    _
  $region3: #{attention_gated.2} parent=0 // loop_header
    %s14 = sphi 0, %s18
    %p15 = scmp.ge.s32.totalorder %s14, 4
    %s24 = sphi 0, %s26
    %s27 = sphi 0, %s24
    %s28 = sphi 0, %s27
    %s44 = sphi 0, %s28
    %s48 = sphi 0, %s48
    %s50 = sphi 0, %s48
    %s51 = sphi 0, %s50
    %s65 = sphi 0, %s51
    %s69 = sphi 0, %s69
    %s71 = sphi 0, %s69
    %s72 = sphi 0, %s71
    %s86 = sphi 0, %s72
    %s90 = sphi 0, %s90
    %s92 = sphi 0, %s90
    %s93 = sphi 0, %s92
    %s107 = sphi 0, %s93
    %s111 = sphi 0, %s111
    %s113 = sphi 0, %s111
    %s114 = sphi 0, %s113
    %s128 = sphi 0, %s114
    %s134 = sphi 0, %s136
    %s137 = sphi 0, %s134
    %s138 = sphi 0, %s137
    %s154 = sphi 0, %s138
    %s158 = sphi 0, %s158
    %s160 = sphi 0, %s158
    %s161 = sphi 0, %s160
    %s175 = sphi 0, %s161
    %s179 = sphi 0, %s179
    %s181 = sphi 0, %s179
    %s182 = sphi 0, %s181
    %s196 = sphi 0, %s182
  $region4: #{attention_gated.2} parent=0 // loop_header_branch
    %17 = sbr.rel (%p15) target = $region8
  $region5: #{attention_gated.2} parent=0 // loop_body
    %s19 = ssub.s32 %s14, 1
    %s20 = ssub.s32 %s14, 2
    %s21 = sadd.s32 %s14, 1
    %s22 = ssub.s32 %s14, %s21
    %p23 = scmp.eq.s32.totalorder %s22, 0
    %s25 = sadd.s32 %s24, 1
    %s26 = scalar_select %p23, %s24, %s25
    %p29 = pneg %p23
    %p30 = scmp.eq.s32.totalorder %s14, 1
    %p31 = por %p29, %p30
    %p32 = scmp.ne.s32.totalorder %s24, %s27
    %p33 = scmp.eq.s32.totalorder %s14, 0
    %p34 = por %p32, %p33
    %p35 = scmp.ne.s32.totalorder %s24, %s27
    %p36 = scmp.eq.s32.totalorder %s19, 1
    %p37 = por %p35, %p36
    %p38 = scmp.ne.s32.totalorder %s27, %s28
    %p39 = scmp.eq.s32.totalorder %s19, 0
    %p40 = por %p38, %p39
    %p41 = scmp.ne.s32.totalorder %s27, %s28
    %p42 = scmp.eq.s32.totalorder %s20, 1
    %p43 = por %p41, %p42
    %p45 = scmp.ne.s32.totalorder %s28, %s44
    %p46 = scmp.eq.s32.totalorder %s20, 0
    %p47 = por %p45, %p46
    %s49 = sadd.s32 %s48, 1
    %p52 = scmp.eq.s32.totalorder %s14, 1
    %p53 = scmp.ne.s32.totalorder %s48, %s50
    %p54 = scmp.eq.s32.totalorder %s14, 0
    %p55 = por %p53, %p54
    %p56 = scmp.ne.s32.totalorder %s48, %s50
    %p57 = scmp.eq.s32.totalorder %s19, 1
    %p58 = por %p56, %p57
    %p59 = scmp.ne.s32.totalorder %s50, %s51
    %p60 = scmp.eq.s32.totalorder %s19, 0
    %p61 = por %p59, %p60
    %p62 = scmp.ne.s32.totalorder %s50, %s51
    %p63 = scmp.eq.s32.totalorder %s20, 1
    %p64 = por %p62, %p63
    %p66 = scmp.ne.s32.totalorder %s51, %s65
    %p67 = scmp.eq.s32.totalorder %s20, 0
    %p68 = por %p66, %p67
    %s70 = sadd.s32 %s69, 1
    %p73 = scmp.eq.s32.totalorder %s14, 1
    %p74 = scmp.ne.s32.totalorder %s69, %s71
    %p75 = scmp.eq.s32.totalorder %s14, 0
    %p76 = por %p74, %p75
    %p77 = scmp.ne.s32.totalorder %s69, %s71
    %p78 = scmp.eq.s32.totalorder %s19, 1
    %p79 = por %p77, %p78
    %p80 = scmp.ne.s32.totalorder %s71, %s72
    %p81 = scmp.eq.s32.totalorder %s19, 0
    %p82 = por %p80, %p81
    %p83 = scmp.ne.s32.totalorder %s71, %s72
    %p84 = scmp.eq.s32.totalorder %s20, 1
    %p85 = por %p83, %p84
    %p87 = scmp.ne.s32.totalorder %s72, %s86
    %p88 = scmp.eq.s32.totalorder %s20, 0
    %p89 = por %p87, %p88
    %s91 = sadd.s32 %s90, 1
    %p94 = scmp.eq.s32.totalorder %s14, 1
    %p95 = scmp.ne.s32.totalorder %s90, %s92
    %p96 = scmp.eq.s32.totalorder %s14, 0
    %p97 = por %p95, %p96
    %p98 = scmp.ne.s32.totalorder %s90, %s92
    %p99 = scmp.eq.s32.totalorder %s19, 1
    %p100 = por %p98, %p99
    %p101 = scmp.ne.s32.totalorder %s92, %s93
    %p102 = scmp.eq.s32.totalorder %s19, 0
    %p103 = por %p101, %p102
    %p104 = scmp.ne.s32.totalorder %s92, %s93
    %p105 = scmp.eq.s32.totalorder %s20, 1
    %p106 = por %p104, %p105
    %p108 = scmp.ne.s32.totalorder %s93, %s107
    %p109 = scmp.eq.s32.totalorder %s20, 0
    %p110 = por %p108, %p109
    %s112 = sadd.s32 %s111, 1
    %p115 = scmp.eq.s32.totalorder %s14, 1
    %p116 = scmp.ne.s32.totalorder %s111, %s113
    %p117 = scmp.eq.s32.totalorder %s14, 0
    %p118 = por %p116, %p117
    %p119 = scmp.ne.s32.totalorder %s111, %s113
    %p120 = scmp.eq.s32.totalorder %s19, 1
    %p121 = por %p119, %p120
    %p122 = scmp.ne.s32.totalorder %s113, %s114
    %p123 = scmp.eq.s32.totalorder %s19, 0
    %p124 = por %p122, %p123
    %p125 = scmp.ne.s32.totalorder %s113, %s114
    %p126 = scmp.eq.s32.totalorder %s20, 1
    %p127 = por %p125, %p126
    %p129 = scmp.ne.s32.totalorder %s114, %s128
    %p130 = scmp.eq.s32.totalorder %s20, 0
    %p131 = por %p129, %p130
    %s132 = ssub.s32 %s14, %s21
    %p133 = scmp.eq.s32.totalorder %s132, 0
    %s135 = sadd.s32 %s134, 1
    %s136 = scalar_select %p133, %s134, %s135
    %p139 = pneg %p133
    %p140 = scmp.eq.s32.totalorder %s14, 1
    %p141 = por %p139, %p140
    %p142 = scmp.ne.s32.totalorder %s134, %s137
    %p143 = scmp.eq.s32.totalorder %s14, 0
    %p144 = por %p142, %p143
    %p145 = scmp.ne.s32.totalorder %s134, %s137
    %p146 = scmp.eq.s32.totalorder %s19, 1
    %p147 = por %p145, %p146
    %p148 = scmp.ne.s32.totalorder %s137, %s138
    %p149 = scmp.eq.s32.totalorder %s19, 0
    %p150 = por %p148, %p149
    %p151 = scmp.ne.s32.totalorder %s137, %s138
    %p152 = scmp.eq.s32.totalorder %s20, 1
    %p153 = por %p151, %p152
    %p155 = scmp.ne.s32.totalorder %s138, %s154
    %p156 = scmp.eq.s32.totalorder %s20, 0
    %p157 = por %p155, %p156
    %s159 = sadd.s32 %s158, 1
    %p162 = scmp.eq.s32.totalorder %s14, 1
    %p163 = scmp.ne.s32.totalorder %s158, %s160
    %p164 = scmp.eq.s32.totalorder %s14, 0
    %p165 = por %p163, %p164
    %p166 = scmp.ne.s32.totalorder %s158, %s160
    %p167 = scmp.eq.s32.totalorder %s19, 1
    %p168 = por %p166, %p167
    %p169 = scmp.ne.s32.totalorder %s160, %s161
    %p170 = scmp.eq.s32.totalorder %s19, 0
    %p171 = por %p169, %p170
    %p172 = scmp.ne.s32.totalorder %s160, %s161
    %p173 = scmp.eq.s32.totalorder %s20, 1
    %p174 = por %p172, %p173
    %p176 = scmp.ne.s32.totalorder %s161, %s175
    %p177 = scmp.eq.s32.totalorder %s20, 0
    %p178 = por %p176, %p177
    %s180 = sadd.s32 %s179, 1
    %p183 = scmp.eq.s32.totalorder %s14, 1
    %p184 = scmp.ne.s32.totalorder %s179, %s181
    %p185 = scmp.eq.s32.totalorder %s14, 0
    %p186 = por %p184, %p185
    %p187 = scmp.ne.s32.totalorder %s179, %s181
    %p188 = scmp.eq.s32.totalorder %s19, 1
    %p189 = por %p187, %p188
    %p190 = scmp.ne.s32.totalorder %s181, %s182
    %p191 = scmp.eq.s32.totalorder %s19, 0
    %p192 = por %p190, %p191
    %p193 = scmp.ne.s32.totalorder %s181, %s182
    %p194 = scmp.eq.s32.totalorder %s20, 1
    %p195 = por %p193, %p194
    %p197 = scmp.ne.s32.totalorder %s182, %s196
    %p198 = scmp.eq.s32.totalorder %s20, 0
    %p199 = por %p197, %p198
    %p200 = scmp.le.s32.totalorder 1, %s14
    %p201 = scmp.lt.s32.totalorder %s14, 3
    %p202 = pnand %p200, %p201
    %p203 = pneg %p202
    // Predicated region
    $region9: #{attention_gated.2} parent=5 // pred_check
      _
    $region10: #{attention_gated.2} parent=5 // pred_check_branch
      %205 = sbr.rel (%p202) target = $region12
    $region11: #{attention_gated.2} parent=5 // pred_region
      %s206 = ssub.s32 %s14, 1
      // Predicated region
      $region13: #{attention_gated.2} parent=11 // pred_check
        %p207 = pneg %p61
      $region14: #{attention_gated.2} parent=11 // pred_check_branch
        %209 = sbr.rel (%p207) target = $region16
      $region15: #{attention_gated.2} parent=11 // pred_region
        _
      $region16: #{attention_gated.2} parent=11 // pred_fallthru
        _
      // Predicated region
      $region17: #{attention_gated.2} parent=11 // pred_check
        %p210 = pneg %p82
      $region18: #{attention_gated.2} parent=11 // pred_check_branch
        %212 = sbr.rel (%p210) target = $region20
      $region19: #{attention_gated.2} parent=11 // pred_region
        _
      $region20: #{attention_gated.2} parent=11 // pred_fallthru
        _
      // Predicated region
      $region21: #{attention_gated.2} parent=11 // pred_check
        %p213 = pneg %p103
      $region22: #{attention_gated.2} parent=11 // pred_check_branch
        %215 = sbr.rel (%p213) target = $region24
      $region23: #{attention_gated.2} parent=11 // pred_region
        _
      $region24: #{attention_gated.2} parent=11 // pred_fallthru
        _
      // Predicated region
      $region25: #{attention_gated.2} parent=11 // pred_check
        %p216 = pneg %p124
      $region26: #{attention_gated.2} parent=11 // pred_check_branch
        %218 = sbr.rel (%p216) target = $region28
      $region27: #{attention_gated.2} parent=11 // pred_region
        _
      $region28: #{attention_gated.2} parent=11 // pred_fallthru
        _
    $region12: #{attention_gated.2} parent=5 // pred_fallthru
      _
    %p219 = scmp.lt.s32.totalorder %s14, 2
    // Predicated region
    $region29: #{attention_gated.2} parent=5 // pred_check
      %p220 = pneg %p219
    $region30: #{attention_gated.2} parent=5 // pred_check_branch
      %222 = sbr.rel (%p220) target = $region32
    $region31: #{attention_gated.2} parent=5 // pred_region
      // Predicated region
      $region33: #{attention_gated.2} parent=31 // pred_check
        %p223 = pneg %p34
      $region34: #{attention_gated.2} parent=31 // pred_check_branch
        %225 = sbr.rel (%p223) target = $region36
      $region35: #{attention_gated.2} parent=31 // pred_region
        %s226 = smul.u32 16, %s14
        %p227 = scmp.lt.s32.totalorder %s226, 31
        %s228 = scalar_select %p227, %s226, 31
        %s229 = smul.addr %s228, 8
        %s230 = scalar_lea.vmem %s0, %s229
        %s231 = smul.u32 16, %s14
      $region36: #{attention_gated.2} parent=31 // pred_fallthru
        _
    $region32: #{attention_gated.2} parent=5 // pred_fallthru
      _
    %p232 = scmp.le.s32.totalorder 1, %s14
    %p233 = scmp.lt.s32.totalorder %s14, 3
    %p234 = pnand %p232, %p233
    %p235 = pneg %p234
    // Predicated region
    $region37: #{attention_gated.2} parent=5 // pred_check
      _
    $region38: #{attention_gated.2} parent=5 // pred_check_branch
      %237 = sbr.rel (%p234) target = $region40
    $region39: #{attention_gated.2} parent=5 // pred_region
      %s238 = ssub.s32 %s14, 1
      %s239 = smul.u32 16, %s19
      %p240 = scmp.lt.s32.totalorder %s239, 31
      %s241 = scalar_select %p240, %s239, 31
      %s242 = smul.addr %s241, 8
      %s243 = scalar_lea.vmem %s0, %s242
      %p244 = pneg %p40
      %p245 = pneg %p37
      %p246 = pneg %p61
      %p247 = pneg %p58
      %p248 = pneg %p82
      %p249 = pneg %p79
      %p250 = pneg %p103
      %p251 = pneg %p100
      %p252 = pneg %p124
      %p253 = pneg %p121
      %p254 = pneg %p150
      %p255 = pneg %p147
      %p256 = scmp.lt.s32.totalorder %s19, 1
      %s257 = scalar_select %p256, %s19, 1
      %s258 = smul.addr %s257, 2
      %s259 = scalar_lea.vmem %s5, %s258
      %p260 = pneg %p171
      %p261 = pneg %p168
      %p262 = pneg %p192
      %p263 = pneg %p189
      %s264 = smul.u32 16, %s19
      %p265 = scmp.lt.s32.totalorder %s264, 31
      %s266 = scalar_select %p265, %s264, 31
      %s267 = smul.addr %s266, 8
      %s268 = scalar_lea.vmem %s0, %s267
      %s269 = smul.u32 16, %s19
      %p270 = scmp.lt.s32.totalorder %s19, 1
      %s271 = scalar_select %p270, %s19, 1
      %s272 = smul.addr %s271, 2
      %s273 = scalar_lea.vmem %s5, %s272
      %p274 = scmp.eq.s32.totalorder %s19, 0
      // Predicated region
      $region41: #{attention_gated.2} parent=39 // pred_check
        %p275 = pneg %p274
      $region42: #{attention_gated.2} parent=39 // pred_check_branch
        %277 = sbr.rel (%p275) target = $region44
      $region43: #{attention_gated.2} parent=39 // pred_region
        %vm278 = vcmask 1024
        %279 = vst.msk [vmem:[#allocation2] sm:$0x3] %vm278, -1e+30
        %280 = vst.msk [vmem:[#allocation3] sm:$0x3] %vm278, 0.0
      $region44: #{attention_gated.2} parent=39 // pred_fallthru
        _
      %v281 = vld [vmem:[%s268] sm:$0xff]
      %v282 = vld [vmem:[%s268 + $0x8] sm:$0xff]
      %v283 = vld [vmem:[%s268 + $0x10] sm:$0xff]
      %v284 = vld [vmem:[%s268 + $0x18] sm:$0xff]
      %v285 = vld [vmem:[%s268 + $0x20] sm:$0xff]
      %v286 = vld [vmem:[%s268 + $0x28] sm:$0xff]
      %v287 = vld [vmem:[%s268 + $0x30] sm:$0xff]
      %v288 = vld [vmem:[%s268 + $0x38] sm:$0xff]
      %v289 = vld [vmem:[%s268 + $0x40] sm:$0xff]
      %v290 = vld [vmem:[%s268 + $0x48] sm:$0xff]
      %v291 = vld [vmem:[%s268 + $0x50] sm:$0xff]
      %v292 = vld [vmem:[%s268 + $0x58] sm:$0xff]
      %v293 = vld [vmem:[%s268 + $0x60] sm:$0xff]
      %v294 = vld [vmem:[%s268 + $0x68] sm:$0xff]
      %v295 = vld [vmem:[%s268 + $0x70] sm:$0xff]
      %v296 = vld [vmem:[%s268 + $0x78] sm:$0xff]
      %v297 = vld [vmem:[%s1] sm:$0xff]
      %v298 = vld [vmem:[%s1 + $0x8] sm:$0xff]
      %v299 = vld [vmem:[%s1 + $0x10] sm:$0xff]
      %v300 = vld [vmem:[%s1 + $0x18] sm:$0xff]
      %v301 = vld [vmem:[%s1 + $0x20] sm:$0xff]
      %v302 = vld [vmem:[%s1 + $0x28] sm:$0xff]
      %v303 = vld [vmem:[%s1 + $0x30] sm:$0xff]
      %v304 = vld [vmem:[%s1 + $0x38] sm:$0xff]
      %v305 = vld [vmem:[%s2] sm:$0x1]
      %v307 = vperm.slane %v305, 0
      %vm309 = vcmask 523264
      %v311 = vsel %vm309, %v281, 0
      %v314 = vsel %vm309, %v282, 0
      %v317 = vsel %vm309, %v283, 0
      %v320 = vsel %vm309, %v284, 0
      %v323 = vsel %vm309, %v285, 0
      %v326 = vsel %vm309, %v286, 0
      %v329 = vsel %vm309, %v287, 0
      %v332 = vsel %vm309, %v288, 0
      %v335 = vsel %vm309, %v289, 0
      %v338 = vsel %vm309, %v290, 0
      %v341 = vsel %vm309, %v291, 0
      %v344 = vsel %vm309, %v292, 0
      %v347 = vsel %vm309, %v293, 0
      %v350 = vsel %vm309, %v294, 0
      %v353 = vsel %vm309, %v295, 0
      %v356 = vsel %vm309, %v296, 0
      %358 = vmatpush.msra.mxu0 0.0
      %359 = vmatpush.msra.mxu0 0.0
      %360 = vmatpush.msra.mxu0 0.0
      %361 = vmatpush.msra.mxu0 0.0
      %362 = vmatpush.msra.mxu0 0.0
      %363 = vmatpush.msra.mxu0 0.0
      %364 = vmatpush.msra.mxu0 0.0
      %365 = vmatpush.msra.mxu0 0.0
      %366 = vmatpush.msra.mxu0 %v304
      %367 = vmatpush.msra.mxu0 %v303
      %368 = vmatpush.msra.mxu0 %v302
      %369 = vmatpush.msra.mxu0 %v301
      %370 = vmatpush.msra.mxu0 %v300
      %371 = vmatpush.msra.mxu0 %v299
      %372 = vmatpush.msra.mxu0 %v298
      %373 = vmatpush.msra.mxu0 %v297
      %374 = vmatmul.f32.gmra.mxu0 %v311
      %v375 = vpop.f32.mrf.mxu0
      %v376 = vadd.f32 %v307, %v375
      %377 = vmatmul.f32.gmra.mxu0 %v314
      %v378 = vpop.f32.mrf.mxu0
      %v379 = vadd.f32 %v307, %v378
      %380 = vmatmul.f32.gmra.mxu0 %v317
      %v381 = vpop.f32.mrf.mxu0
      %v382 = vadd.f32 %v307, %v381
      %383 = vmatmul.f32.gmra.mxu0 %v320
      %v384 = vpop.f32.mrf.mxu0
      %v385 = vadd.f32 %v307, %v384
      %386 = vmatmul.f32.gmra.mxu0 %v323
      %v387 = vpop.f32.mrf.mxu0
      %v388 = vadd.f32 %v307, %v387
      %389 = vmatmul.f32.gmra.mxu0 %v326
      %v390 = vpop.f32.mrf.mxu0
      %v391 = vadd.f32 %v307, %v390
      %392 = vmatmul.f32.gmra.mxu0 %v329
      %v393 = vpop.f32.mrf.mxu0
      %v394 = vadd.f32 %v307, %v393
      %395 = vmatmul.f32.gmra.mxu0 %v332
      %v396 = vpop.f32.mrf.mxu0
      %v397 = vadd.f32 %v307, %v396
      %398 = vmatmul.f32.gmra.mxu0 %v335
      %v399 = vpop.f32.mrf.mxu0
      %v400 = vadd.f32 %v307, %v399
      %401 = vmatmul.f32.gmra.mxu0 %v338
      %v402 = vpop.f32.mrf.mxu0
      %v403 = vadd.f32 %v307, %v402
      %404 = vmatmul.f32.gmra.mxu0 %v341
      %v405 = vpop.f32.mrf.mxu0
      %v406 = vadd.f32 %v307, %v405
      %407 = vmatmul.f32.gmra.mxu0 %v344
      %v408 = vpop.f32.mrf.mxu0
      %v409 = vadd.f32 %v307, %v408
      %410 = vmatmul.f32.gmra.mxu0 %v347
      %v411 = vpop.f32.mrf.mxu0
      %v412 = vadd.f32 %v307, %v411
      %413 = vmatmul.f32.gmra.mxu0 %v350
      %v414 = vpop.f32.mrf.mxu0
      %v415 = vadd.f32 %v307, %v414
      %416 = vmatmul.f32.gmra.mxu0 %v353
      %v417 = vpop.f32.mrf.mxu0
      %v418 = vadd.f32 %v307, %v417
      %419 = vmatmul.f32.gmra.mxu0 %v356
      %v420 = vpop.f32.mrf.mxu0
      %v421 = vadd.f32 %v307, %v420
      %422 = vdwg.mxu0
      %v423 = vtanh.pop %v376
      %v424 = vtanh.pop %v379
      %v425 = vtanh.pop %v382
      %v426 = vtanh.pop %v385
      %v427 = vtanh.pop %v388
      %v428 = vtanh.pop %v391
      %v429 = vtanh.pop %v394
      %v430 = vtanh.pop %v397
      %v431 = vtanh.pop %v400
      %v432 = vtanh.pop %v403
      %v433 = vtanh.pop %v406
      %v434 = vtanh.pop %v409
      %v435 = vtanh.pop %v412
      %v436 = vtanh.pop %v415
      %v437 = vtanh.pop %v418
      %v438 = vtanh.pop %v421
      %v439 = vxor.u32 %v376, 2147483648
      %v440 = vxor.u32 %v379, 2147483648
      %v441 = vxor.u32 %v382, 2147483648
      %v442 = vxor.u32 %v385, 2147483648
      %v443 = vxor.u32 %v388, 2147483648
      %v444 = vxor.u32 %v391, 2147483648
      %v445 = vxor.u32 %v394, 2147483648
      %v446 = vxor.u32 %v397, 2147483648
      %v447 = vxor.u32 %v400, 2147483648
      %v448 = vxor.u32 %v403, 2147483648
      %v449 = vxor.u32 %v406, 2147483648
      %v450 = vxor.u32 %v409, 2147483648
      %v451 = vxor.u32 %v412, 2147483648
      %v452 = vxor.u32 %v415, 2147483648
      %v453 = vxor.u32 %v418, 2147483648
      %v454 = vxor.u32 %v421, 2147483648
      %v455 = vmul.f32 %v439, 1.442695
      %v456 = vpow.pop %v455
      %v457 = vmul.f32 %v440, 1.442695
      %v458 = vpow.pop %v457
      %v459 = vmul.f32 %v441, 1.442695
      %v460 = vpow.pop %v459
      %v461 = vmul.f32 %v442, 1.442695
      %v462 = vpow.pop %v461
      %v463 = vmul.f32 %v443, 1.442695
      %v464 = vpow.pop %v463
      %v465 = vmul.f32 %v444, 1.442695
      %v466 = vpow.pop %v465
      %v467 = vmul.f32 %v445, 1.442695
      %v468 = vpow.pop %v467
      %v469 = vmul.f32 %v446, 1.442695
      %v470 = vpow.pop %v469
      %v471 = vmul.f32 %v447, 1.442695
      %v472 = vpow.pop %v471
      %v473 = vmul.f32 %v448, 1.442695
      %v474 = vpow.pop %v473
      %v475 = vmul.f32 %v449, 1.442695
      %v476 = vpow.pop %v475
      %v477 = vmul.f32 %v450, 1.442695
      %v478 = vpow.pop %v477
      %v479 = vmul.f32 %v451, 1.442695
      %v480 = vpow.pop %v479
      %v481 = vmul.f32 %v452, 1.442695
      %v482 = vpow.pop %v481
      %v483 = vmul.f32 %v453, 1.442695
      %v484 = vpow.pop %v483
      %v485 = vmul.f32 %v454, 1.442695
      %v486 = vpow.pop %v485
      %v487 = vadd.f32 %v456, 1.0
      %v488 = vadd.f32 %v458, 1.0
      %v489 = vadd.f32 %v460, 1.0
      %v490 = vadd.f32 %v462, 1.0
      %v491 = vadd.f32 %v464, 1.0
      %v492 = vadd.f32 %v466, 1.0
      %v493 = vadd.f32 %v468, 1.0
      %v494 = vadd.f32 %v470, 1.0
      %v495 = vadd.f32 %v472, 1.0
      %v496 = vadd.f32 %v474, 1.0
      %v497 = vadd.f32 %v476, 1.0
      %v498 = vadd.f32 %v478, 1.0
      %v499 = vadd.f32 %v480, 1.0
      %v500 = vadd.f32 %v482, 1.0
      %v501 = vadd.f32 %v484, 1.0
      %v502 = vadd.f32 %v486, 1.0
      %v503 = vrcp.pop %v487
      %v504 = vmul.f32 %v487, %v503
      %v505 = vsub.f32 1.0, %v504
      %v506 = vmul.f32 %v503, %v505
      %v507 = vadd.f32 %v503, %v506
      %vm508 = vweird.f32 %v487
      %vm509 = vweird.f32 %v503
      %vm510 = vmor %vm508, %vm509
      %v511 = vsel %vm510, %v503, %v507
      %v512 = vand.u32 2147483647, %v487
      %vm513 = vcmp.eq.f32.partialorder %v512, 8.507059e+37
      %v514 = vand.u32 %v487, 2147483648
      %v515 = vor.u32 1.1754944e-38, %v514
      %v516 = vsel %vm513, %v515, %v511
      %v517 = vmul.f32 1.0, %v516
      %v518 = vrcp.pop %v488
      %v519 = vmul.f32 %v488, %v518
      %v520 = vsub.f32 1.0, %v519
      %v521 = vmul.f32 %v518, %v520
      %v522 = vadd.f32 %v518, %v521
      %vm523 = vweird.f32 %v488
      %vm524 = vweird.f32 %v518
      %vm525 = vmor %vm523, %vm524
      %v526 = vsel %vm525, %v518, %v522
      %v527 = vand.u32 2147483647, %v488
      %vm528 = vcmp.eq.f32.partialorder %v527, 8.507059e+37
      %v529 = vand.u32 %v488, 2147483648
      %v530 = vor.u32 1.1754944e-38, %v529
      %v531 = vsel %vm528, %v530, %v526
      %v532 = vmul.f32 1.0, %v531
      %v533 = vrcp.pop %v489
      %v534 = vmul.f32 %v489, %v533
      %v535 = vsub.f32 1.0, %v534
      %v536 = vmul.f32 %v533, %v535
      %v537 = vadd.f32 %v533, %v536
      %vm538 = vweird.f32 %v489
      %vm539 = vweird.f32 %v533
      %vm540 = vmor %vm538, %vm539
      %v541 = vsel %vm540, %v533, %v537
      %v542 = vand.u32 2147483647, %v489
      %vm543 = vcmp.eq.f32.partialorder %v542, 8.507059e+37
      %v544 = vand.u32 %v489, 2147483648
      %v545 = vor.u32 1.1754944e-38, %v544
      %v546 = vsel %vm543, %v545, %v541
      %v547 = vmul.f32 1.0, %v546
      %v548 = vrcp.pop %v490
      %v549 = vmul.f32 %v490, %v548
      %v550 = vsub.f32 1.0, %v549
      %v551 = vmul.f32 %v548, %v550
      %v552 = vadd.f32 %v548, %v551
      %vm553 = vweird.f32 %v490
      %vm554 = vweird.f32 %v548
      %vm555 = vmor %vm553, %vm554
      %v556 = vsel %vm555, %v548, %v552
      %v557 = vand.u32 2147483647, %v490
      %vm558 = vcmp.eq.f32.partialorder %v557, 8.507059e+37
      %v559 = vand.u32 %v490, 2147483648
      %v560 = vor.u32 1.1754944e-38, %v559
      %v561 = vsel %vm558, %v560, %v556
      %v562 = vmul.f32 1.0, %v561
      %v563 = vrcp.pop %v491
      %v564 = vmul.f32 %v491, %v563
      %v565 = vsub.f32 1.0, %v564
      %v566 = vmul.f32 %v563, %v565
      %v567 = vadd.f32 %v563, %v566
      %vm568 = vweird.f32 %v491
      %vm569 = vweird.f32 %v563
      %vm570 = vmor %vm568, %vm569
      %v571 = vsel %vm570, %v563, %v567
      %v572 = vand.u32 2147483647, %v491
      %vm573 = vcmp.eq.f32.partialorder %v572, 8.507059e+37
      %v574 = vand.u32 %v491, 2147483648
      %v575 = vor.u32 1.1754944e-38, %v574
      %v576 = vsel %vm573, %v575, %v571
      %v577 = vmul.f32 1.0, %v576
      %v578 = vrcp.pop %v492
      %v579 = vmul.f32 %v492, %v578
      %v580 = vsub.f32 1.0, %v579
      %v581 = vmul.f32 %v578, %v580
      %v582 = vadd.f32 %v578, %v581
      %vm583 = vweird.f32 %v492
      %vm584 = vweird.f32 %v578
      %vm585 = vmor %vm583, %vm584
      %v586 = vsel %vm585, %v578, %v582
      %v587 = vand.u32 2147483647, %v492
      %vm588 = vcmp.eq.f32.partialorder %v587, 8.507059e+37
      %v589 = vand.u32 %v492, 2147483648
      %v590 = vor.u32 1.1754944e-38, %v589
      %v591 = vsel %vm588, %v590, %v586
      %v592 = vmul.f32 1.0, %v591
      %v593 = vrcp.pop %v493
      %v594 = vmul.f32 %v493, %v593
      %v595 = vsub.f32 1.0, %v594
      %v596 = vmul.f32 %v593, %v595
      %v597 = vadd.f32 %v593, %v596
      %vm598 = vweird.f32 %v493
      %vm599 = vweird.f32 %v593
      %vm600 = vmor %vm598, %vm599
      %v601 = vsel %vm600, %v593, %v597
      %v602 = vand.u32 2147483647, %v493
      %vm603 = vcmp.eq.f32.partialorder %v602, 8.507059e+37
      %v604 = vand.u32 %v493, 2147483648
      %v605 = vor.u32 1.1754944e-38, %v604
      %v606 = vsel %vm603, %v605, %v601
      %v607 = vmul.f32 1.0, %v606
      %v608 = vrcp.pop %v494
      %v609 = vmul.f32 %v494, %v608
      %v610 = vsub.f32 1.0, %v609
      %v611 = vmul.f32 %v608, %v610
      %v612 = vadd.f32 %v608, %v611
      %vm613 = vweird.f32 %v494
      %vm614 = vweird.f32 %v608
      %vm615 = vmor %vm613, %vm614
      %v616 = vsel %vm615, %v608, %v612
      %v617 = vand.u32 2147483647, %v494
      %vm618 = vcmp.eq.f32.partialorder %v617, 8.507059e+37
      %v619 = vand.u32 %v494, 2147483648
      %v620 = vor.u32 1.1754944e-38, %v619
      %v621 = vsel %vm618, %v620, %v616
      %v622 = vmul.f32 1.0, %v621
      %v623 = vrcp.pop %v495
      %v624 = vmul.f32 %v495, %v623
      %v625 = vsub.f32 1.0, %v624
      %v626 = vmul.f32 %v623, %v625
      %v627 = vadd.f32 %v623, %v626
      %vm628 = vweird.f32 %v495
      %vm629 = vweird.f32 %v623
      %vm630 = vmor %vm628, %vm629
      %v631 = vsel %vm630, %v623, %v627
      %v632 = vand.u32 2147483647, %v495
      %vm633 = vcmp.eq.f32.partialorder %v632, 8.507059e+37
      %v634 = vand.u32 %v495, 2147483648
      %v635 = vor.u32 1.1754944e-38, %v634
      %v636 = vsel %vm633, %v635, %v631
      %v637 = vmul.f32 1.0, %v636
      %v638 = vrcp.pop %v496
      %v639 = vmul.f32 %v496, %v638
      %v640 = vsub.f32 1.0, %v639
      %v641 = vmul.f32 %v638, %v640
      %v642 = vadd.f32 %v638, %v641
      %vm643 = vweird.f32 %v496
      %vm644 = vweird.f32 %v638
      %vm645 = vmor %vm643, %vm644
      %v646 = vsel %vm645, %v638, %v642
      %v647 = vand.u32 2147483647, %v496
      %vm648 = vcmp.eq.f32.partialorder %v647, 8.507059e+37
      %v649 = vand.u32 %v496, 2147483648
      %v650 = vor.u32 1.1754944e-38, %v649
      %v651 = vsel %vm648, %v650, %v646
      %v652 = vmul.f32 1.0, %v651
      %v653 = vrcp.pop %v497
      %v654 = vmul.f32 %v497, %v653
      %v655 = vsub.f32 1.0, %v654
      %v656 = vmul.f32 %v653, %v655
      %v657 = vadd.f32 %v653, %v656
      %vm658 = vweird.f32 %v497
      %vm659 = vweird.f32 %v653
      %vm660 = vmor %vm658, %vm659
      %v661 = vsel %vm660, %v653, %v657
      %v662 = vand.u32 2147483647, %v497
      %vm663 = vcmp.eq.f32.partialorder %v662, 8.507059e+37
      %v664 = vand.u32 %v497, 2147483648
      %v665 = vor.u32 1.1754944e-38, %v664
      %v666 = vsel %vm663, %v665, %v661
      %v667 = vmul.f32 1.0, %v666
      %v668 = vrcp.pop %v498
      %v669 = vmul.f32 %v498, %v668
      %v670 = vsub.f32 1.0, %v669
      %v671 = vmul.f32 %v668, %v670
      %v672 = vadd.f32 %v668, %v671
      %vm673 = vweird.f32 %v498
      %vm674 = vweird.f32 %v668
      %vm675 = vmor %vm673, %vm674
      %v676 = vsel %vm675, %v668, %v672
      %v677 = vand.u32 2147483647, %v498
      %vm678 = vcmp.eq.f32.partialorder %v677, 8.507059e+37
      %v679 = vand.u32 %v498, 2147483648
      %v680 = vor.u32 1.1754944e-38, %v679
      %v681 = vsel %vm678, %v680, %v676
      %v682 = vmul.f32 1.0, %v681
      %v683 = vrcp.pop %v499
      %v684 = vmul.f32 %v499, %v683
      %v685 = vsub.f32 1.0, %v684
      %v686 = vmul.f32 %v683, %v685
      %v687 = vadd.f32 %v683, %v686
      %vm688 = vweird.f32 %v499
      %vm689 = vweird.f32 %v683
      %vm690 = vmor %vm688, %vm689
      %v691 = vsel %vm690, %v683, %v687
      %v692 = vand.u32 2147483647, %v499
      %vm693 = vcmp.eq.f32.partialorder %v692, 8.507059e+37
      %v694 = vand.u32 %v499, 2147483648
      %v695 = vor.u32 1.1754944e-38, %v694
      %v696 = vsel %vm693, %v695, %v691
      %v697 = vmul.f32 1.0, %v696
      %v698 = vrcp.pop %v500
      %v699 = vmul.f32 %v500, %v698
      %v700 = vsub.f32 1.0, %v699
      %v701 = vmul.f32 %v698, %v700
      %v702 = vadd.f32 %v698, %v701
      %vm703 = vweird.f32 %v500
      %vm704 = vweird.f32 %v698
      %vm705 = vmor %vm703, %vm704
      %v706 = vsel %vm705, %v698, %v702
      %v707 = vand.u32 2147483647, %v500
      %vm708 = vcmp.eq.f32.partialorder %v707, 8.507059e+37
      %v709 = vand.u32 %v500, 2147483648
      %v710 = vor.u32 1.1754944e-38, %v709
      %v711 = vsel %vm708, %v710, %v706
      %v712 = vmul.f32 1.0, %v711
      %v713 = vrcp.pop %v501
      %v714 = vmul.f32 %v501, %v713
      %v715 = vsub.f32 1.0, %v714
      %v716 = vmul.f32 %v713, %v715
      %v717 = vadd.f32 %v713, %v716
      %vm718 = vweird.f32 %v501
      %vm719 = vweird.f32 %v713
      %vm720 = vmor %vm718, %vm719
      %v721 = vsel %vm720, %v713, %v717
      %v722 = vand.u32 2147483647, %v501
      %vm723 = vcmp.eq.f32.partialorder %v722, 8.507059e+37
      %v724 = vand.u32 %v501, 2147483648
      %v725 = vor.u32 1.1754944e-38, %v724
      %v726 = vsel %vm723, %v725, %v721
      %v727 = vmul.f32 1.0, %v726
      %v728 = vrcp.pop %v502
      %v729 = vmul.f32 %v502, %v728
      %v730 = vsub.f32 1.0, %v729
      %v731 = vmul.f32 %v728, %v730
      %v732 = vadd.f32 %v728, %v731
      %vm733 = vweird.f32 %v502
      %vm734 = vweird.f32 %v728
      %vm735 = vmor %vm733, %vm734
      %v736 = vsel %vm735, %v728, %v732
      %v737 = vand.u32 2147483647, %v502
      %vm738 = vcmp.eq.f32.partialorder %v737, 8.507059e+37
      %v739 = vand.u32 %v502, 2147483648
      %v740 = vor.u32 1.1754944e-38, %v739
      %v741 = vsel %vm738, %v740, %v736
      %v742 = vmul.f32 1.0, %v741
      %759 = vrot.lane.b32.xlu0 %v517, 96
      %v760 = vpop.permute.xlu0 %759
      %761 = vrot.lane.b32.xlu0 %v532, 96
      %v762 = vpop.permute.xlu0 %761
      %763 = vrot.lane.b32.xlu0 %v547, 96
      %v764 = vpop.permute.xlu0 %763
      %765 = vrot.lane.b32.xlu0 %v562, 96
      %v766 = vpop.permute.xlu0 %765
      %767 = vrot.lane.b32.xlu0 %v577, 96
      %v768 = vpop.permute.xlu0 %767
      %769 = vrot.lane.b32.xlu0 %v592, 96
      %v770 = vpop.permute.xlu0 %769
      %771 = vrot.lane.b32.xlu0 %v607, 96
      %v772 = vpop.permute.xlu0 %771
      %773 = vrot.lane.b32.xlu0 %v622, 96
      %v774 = vpop.permute.xlu0 %773
      %775 = vrot.lane.b32.xlu0 %v637, 96
      %v776 = vpop.permute.xlu0 %775
      %777 = vrot.lane.b32.xlu0 %v652, 96
      %v778 = vpop.permute.xlu0 %777
      %779 = vrot.lane.b32.xlu0 %v667, 96
      %v780 = vpop.permute.xlu0 %779
      %781 = vrot.lane.b32.xlu0 %v682, 96
      %v782 = vpop.permute.xlu0 %781
      %783 = vrot.lane.b32.xlu0 %v697, 96
      %v784 = vpop.permute.xlu0 %783
      %785 = vrot.lane.b32.xlu0 %v712, 96
      %v786 = vpop.permute.xlu0 %785
      %787 = vrot.lane.b32.xlu0 %v727, 96
      %v788 = vpop.permute.xlu0 %787
      %789 = vrot.lane.b32.xlu0 %v742, 96
      %v790 = vpop.permute.xlu0 %789
      %v807 = vmul.f32 %v423, %v760
      %v808 = vmul.f32 %v424, %v762
      %v809 = vmul.f32 %v425, %v764
      %v810 = vmul.f32 %v426, %v766
      %v811 = vmul.f32 %v427, %v768
      %v812 = vmul.f32 %v428, %v770
      %v813 = vmul.f32 %v429, %v772
      %v814 = vmul.f32 %v430, %v774
      %v815 = vmul.f32 %v431, %v776
      %v816 = vmul.f32 %v432, %v778
      %v817 = vmul.f32 %v433, %v780
      %v818 = vmul.f32 %v434, %v782
      %v819 = vmul.f32 %v435, %v784
      %v820 = vmul.f32 %v436, %v786
      %v821 = vmul.f32 %v437, %v788
      %v822 = vmul.f32 %v438, %v790
      %v823 = vld [vmem:[%s3] sm:$0x3]
      %v824 = vld [vmem:[%s4] sm:$0x3]
      %826 = vset.pattern.permute.xlu0 0
      %827 = vperm.xlu0 %826, %v824
      %v828 = vpop.permute.xlu0 %827
      %vm830 = vcmask 261120
      %v832 = vsel %vm830, %v823, 0
      %v835 = vsel %vm830, %v807, 0
      %v838 = vsel %vm830, %v808, 0
      %v841 = vsel %vm830, %v809, 0
      %v844 = vsel %vm830, %v810, 0
      %v847 = vsel %vm830, %v811, 0
      %v850 = vsel %vm830, %v812, 0
      %v853 = vsel %vm830, %v813, 0
      %v856 = vsel %vm830, %v814, 0
      %v859 = vsel %vm830, %v815, 0
      %v862 = vsel %vm830, %v816, 0
      %v865 = vsel %vm830, %v817, 0
      %v868 = vsel %vm830, %v818, 0
      %v871 = vsel %vm830, %v819, 0
      %v874 = vsel %vm830, %v820, 0
      %v877 = vsel %vm830, %v821, 0
      %v880 = vsel %vm830, %v822, 0
      %882 = vmatpush.xpose.msra.mxu0 %v880
      %883 = vmatpush.xpose.msra.mxu0 %v877
      %884 = vmatpush.xpose.msra.mxu0 %v874
      %885 = vmatpush.xpose.msra.mxu0 %v871
      %886 = vmatpush.xpose.msra.mxu0 %v868
      %887 = vmatpush.xpose.msra.mxu0 %v865
      %888 = vmatpush.xpose.msra.mxu0 %v862
      %889 = vmatpush.xpose.msra.mxu0 %v859
      %890 = vmatpush.xpose.msra.mxu0 %v856
      %891 = vmatpush.xpose.msra.mxu0 %v853
      %892 = vmatpush.xpose.msra.mxu0 %v850
      %893 = vmatpush.xpose.msra.mxu0 %v847
      %894 = vmatpush.xpose.msra.mxu0 %v844
      %895 = vmatpush.xpose.msra.mxu0 %v841
      %896 = vmatpush.xpose.msra.mxu0 %v838
      %897 = vmatpush.xpose.msra.mxu0 %v835
      %898 = vmatmul.f32.gmra.mxu0 %v832
      %v899 = vpop.f32.mrf.mxu0
      %v900 = vadd.f32 %v828, %v899
      %901 = vdwg.mxu0
      %v902 = vlaneseq
      %v903 = vand.u32 %v902, 127
      %s904 = smul.u32 %s19, 128
      %v905 = vstv %s904
      %v906 = vadd.s32 %v903, %v905
      %vm907 = vcmp.lt.s32.totalorder %v906, 200
      %v908 = vsel %vm907, %v900, -1e+30
      %909 = vst [vmem:[%s273] sm:$0x3] %v908
      %vm910 = vcmask 1041408
      %v911 = vsel %vm910, %v908, -inf
      %912 = vmax.xlane.f32.xlu0 %v911
      %v913 = vpop.xlane.xlu0 %912
      %v914 = vld [vmem:[#allocation2] sm:$0x3]
      %v915 = vmax.f32 %v914, %v913
      %v916 = vsub.f32 %v914, %v915
      %v917 = vmul.f32 %v916, 1.442695
      %v918 = vpow.pop %v917
      %v919 = vld [vmem:[#allocation3] sm:$0x3]
      %v920 = vmul.f32 %v919, %v918
      %922 = vset.pattern.permute.xlu0 0
      %923 = vperm.xlu0 %922, %v915
      %v924 = vpop.permute.xlu0 %923
      %v926 = vsub.f32 %v908, %v924
      %v927 = vmul.f32 %v926, 1.442695
      %v928 = vpow.pop %v927
      %v929 = vsel %vm910, %v928, 0.0
      %930 = vadd.xlane.f32.xlu0 %v929
      %v931 = vpop.xlane.xlu0 %930
      %v932 = vadd.f32 %v920, %v931
      %vm933 = vcmask 1024
      %934 = vst.msk [vmem:[#allocation3] sm:$0x3] %vm933, %v932
      %935 = vst.msk [vmem:[#allocation2] sm:$0x3] %vm933, %v915
      %v936 = vld [vmem:[#allocation2] sm:$0x3]
      %937 = vst.msk [vmem:[%s6] sm:$0x3] %vm933, %v936
      %v938 = vld [vmem:[#allocation3] sm:$0x3]
      %939 = vst.msk [vmem:[%s7] sm:$0x3] %vm933, %v938
      %p940 = scmp.lt.s32.totalorder %s19, 1
      %s941 = scalar_select %p940, %s19, 1
      %s942 = smul.addr %s941, 2
      %s943 = scalar_lea.vmem %s5, %s942
      // Predicated region
      $region45: #{attention_gated.2} parent=39 // pred_check
        %p944 = pneg %p147
      $region46: #{attention_gated.2} parent=39 // pred_check_branch
        %946 = sbr.rel (%p944) target = $region48
      $region47: #{attention_gated.2} parent=39 // pred_region
        _
      $region48: #{attention_gated.2} parent=39 // pred_fallthru
        _
      // Predicated region
      $region49: #{attention_gated.2} parent=39 // pred_check
        %p947 = pneg %p168
      $region50: #{attention_gated.2} parent=39 // pred_check_branch
        %949 = sbr.rel (%p947) target = $region52
      $region51: #{attention_gated.2} parent=39 // pred_region
        _
      $region52: #{attention_gated.2} parent=39 // pred_fallthru
        _
      // Predicated region
      $region53: #{attention_gated.2} parent=39 // pred_check
        %p950 = pneg %p189
      $region54: #{attention_gated.2} parent=39 // pred_check_branch
        %952 = sbr.rel (%p950) target = $region56
      $region55: #{attention_gated.2} parent=39 // pred_region
        _
      $region56: #{attention_gated.2} parent=39 // pred_fallthru
        _
      // Predicated region
      $region57: #{attention_gated.2} parent=39 // pred_check
        %p953 = pneg %p168
      $region58: #{attention_gated.2} parent=39 // pred_check_branch
        %955 = sbr.rel (%p953) target = $region60
      $region59: #{attention_gated.2} parent=39 // pred_region
        _
      $region60: #{attention_gated.2} parent=39 // pred_fallthru
        _
      // Predicated region
      $region61: #{attention_gated.2} parent=39 // pred_check
        %p956 = pneg %p189
      $region62: #{attention_gated.2} parent=39 // pred_check_branch
        %958 = sbr.rel (%p956) target = $region64
      $region63: #{attention_gated.2} parent=39 // pred_region
        _
      $region64: #{attention_gated.2} parent=39 // pred_fallthru
        _
    $region40: #{attention_gated.2} parent=5 // pred_fallthru
      _
    %p959 = scmp.le.s32.totalorder 2, %s14
    // Predicated region
    $region65: #{attention_gated.2} parent=5 // pred_check
      %p960 = pneg %p959
    $region66: #{attention_gated.2} parent=5 // pred_check_branch
      %962 = sbr.rel (%p960) target = $region68
    $region67: #{attention_gated.2} parent=5 // pred_region
      %s963 = ssub.s32 %s14, 2
      // Predicated region
      $region69: #{attention_gated.2} parent=67 // pred_check
        %p964 = pneg %p153
      $region70: #{attention_gated.2} parent=67 // pred_check_branch
        %966 = sbr.rel (%p964) target = $region72
      $region71: #{attention_gated.2} parent=67 // pred_region
        %p967 = scmp.lt.s32.totalorder %s20, 1
        %s968 = scalar_select %p967, %s20, 1
        %s969 = smul.addr %s968, 2
        %s970 = scalar_lea.vmem %s5, %s969
      $region72: #{attention_gated.2} parent=67 // pred_fallthru
        _
    $region68: #{attention_gated.2} parent=5 // pred_fallthru
      _
  $region6: #{attention_gated.2} parent=0 // loop_footer
    %s18 = sadd.s32 1, %s14
  $region7: #{attention_gated.2} parent=0 // loop_footer_branch
    %13 = sbr.rel target = $region3
  $region8: #{attention_gated.2} parent=0 // loop_exit
    _

</llo_original>
